<compile_context>
chip_gen: v7x
topology: tpu7x:2x2x1
jax: 0.10.0
libtpu: 0.0.40
codegen_flags: <defaults>
</compile_context>

<pallas_src>
import jax
import jax.numpy as jnp
from jax.experimental import pallas as pl
from jax.experimental.pallas import tpu as pltpu

STATE_SPACE = 4      # CartPole-v0 observation dim
ACTION_SPACE = 2     # CartPole-v0 action dim
H1 = 50
H2 = 30

LANE = 128           # TPU lane width

# ---- packed parameter slab layout (all rows sublane-aligned) ---------------
H1P = 56             # 50 padded to multiple of 8
H2P = 32             # 30 padded to multiple of 8
R_W1 = 0             # W1 rows [0, 56)   (50 used), cols [0, 4)
R_W2 = 56            # W2 rows [56, 88)  (30 used), cols [0, 50)
R_W3 = 88            # W3 rows [88, 90),            cols [0, 30)
P_ROWS, P_COLS = 96, 128
BIAS_COL = 120       # biases stored as a column, aligned with their weight rows


def pack_params(params):
    """Pack ((w1,b1),(w2,b2),(w3,b3)) (PyTorch (out,in) orientation) into one
    zero-padded (96, 128) f32 slab.  Zero padding of out/in features is exact."""
    (w1, b1), (w2, b2), (w3, b3) = params
    slab = jnp.zeros((P_ROWS, P_COLS), jnp.float32)
    slab = slab.at[R_W1:R_W1 + H1, :STATE_SPACE].set(w1)
    slab = slab.at[R_W1:R_W1 + H1, BIAS_COL].set(b1.reshape(H1))
    slab = slab.at[R_W2:R_W2 + H2, :H1].set(w2)
    slab = slab.at[R_W2:R_W2 + H2, BIAS_COL].set(b2.reshape(H2))
    slab = slab.at[R_W3:R_W3 + ACTION_SPACE, :H2].set(w3)
    slab = slab.at[R_W3:R_W3 + ACTION_SPACE, BIAS_COL].set(b3.reshape(ACTION_SPACE))
    return slab


def mlp_kernel(x_ref, p_ref, o_ref):
    # Whole network for one batch tile; batch lives on the lane axis.
    # Param slab is grid-invariant and VMEM-resident; all slices are static.
    x = x_ref[...]                                                  # (4,  T)
    w1 = p_ref[R_W1:R_W1 + H1P, 0:STATE_SPACE]                      # (56, 4)
    b1 = p_ref[R_W1:R_W1 + H1P, BIAS_COL:BIAS_COL + 1]              # (56, 1)
    w2 = p_ref[R_W2:R_W2 + H2P, 0:H1P]                              # (32, 56)
    b2 = p_ref[R_W2:R_W2 + H2P, BIAS_COL:BIAS_COL + 1]              # (32, 1)
    w3 = p_ref[R_W3:R_W3 + ACTION_SPACE, 0:H2P]                     # (2,  32)
    b3 = p_ref[R_W3:R_W3 + ACTION_SPACE, BIAS_COL:BIAS_COL + 1]     # (2,  1)

    h1 = jnp.maximum(
        jnp.dot(w1, x, preferred_element_type=jnp.float32) + b1, 0.0)   # (56, T)
    h2 = jnp.maximum(
        jnp.dot(w2, h1, preferred_element_type=jnp.float32) + b2, 0.0)  # (32, T)
    y = jnp.dot(w3, h2, preferred_element_type=jnp.float32) + b3        # (2,  T)
    o_ref[...] = y.astype(o_ref.dtype)


def _round_up(n, m):
    return ((n + m - 1) // m) * m


def shared_net_forward_t(x_t, param_slab, *, batch_tile=4096):
    """Transposed-layout forward: x_t (4, B) f32 -> (2, B) f32."""
    batch = x_t.shape[1]
    batch_tile = max(LANE, _round_up(int(batch_tile), LANE))

    if batch < 2 * LANE:
        # Too small to split: single block equal to the full array (always legal).
        tile, grid_n = batch, 1
    else:
        # Lane-aligned tile, capped so the grid has >= 2 steps (v7x megacore).
        tile = min(batch_tile, _round_up(pl.cdiv(batch, 2), LANE))
        grid_n = pl.cdiv(batch, tile)   # edge block (if any) is masked by Pallas

    cost = pl.CostEstimate(
        flops=2 * batch * (STATE_SPACE * H1 + H1 * H2 + H2 * ACTION_SPACE),
        transcendentals=0,
        bytes_accessed=batch * (STATE_SPACE + ACTION_SPACE) * 4
        + P_ROWS * P_COLS * 4,
    )

    return pl.pallas_call(
        mlp_kernel,
        out_shape=jax.ShapeDtypeStruct((ACTION_SPACE, batch), jnp.float32),
        grid=(grid_n,),
        in_specs=[
            # activations: tiled along the lane (batch) axis
            pl.BlockSpec((STATE_SPACE, tile), lambda i: (0, i)),
            # packed params: grid-invariant -> single 48 KB DMA, reused every step
            pl.BlockSpec((P_ROWS, P_COLS), lambda i: (0, 0)),
        ],
        out_specs=pl.BlockSpec((ACTION_SPACE, tile), lambda i: (0, i)),
        compiler_params=pltpu.CompilerParams(
            dimension_semantics=("parallel",)),
        cost_estimate=cost,
    )(x_t, param_slab)


def shared_net_forward(x, param_slab, *, batch_tile=4096):
    """PyTorch-layout convenience wrapper: x (B, 4) f32 -> (B, 2) f32.

    The transposes are tiny layout-plumbing XLA ops; callers that can adopt
    the batch-in-lanes layout should call shared_net_forward_t directly."""
    return shared_net_forward_t(x.T, param_slab, batch_tile=batch_tile).T


def init_params(key):
    """PyTorch-default Linear init: U(-1/sqrt(fan_in), 1/sqrt(fan_in)),
    weights in PyTorch's native (out_features, in_features) orientation."""
    def linear(key, fan_in, fan_out):
        kw, kb = jax.random.split(key)
        bound = 1.0 / jnp.sqrt(jnp.float32(fan_in))
        w = jax.random.uniform(kw, (fan_out, fan_in), jnp.float32, -bound, bound)
        b = jax.random.uniform(kb, (fan_out,), jnp.float32, -bound, bound)
        return w, b

    k1, k2, k3 = jax.random.split(key, 3)
    return (linear(k1, STATE_SPACE, H1),
            linear(k2, H1, H2),
            linear(k3, H2, ACTION_SPACE))


def reference_forward(x, params):
    """Plain-JAX reference matching the PyTorch module."""
    (w1, b1), (w2, b2), (w3, b3) = params
    h1 = jnp.maximum(x @ w1.T + b1, 0.0)
    h2 = jnp.maximum(h1 @ w2.T + b2, 0.0)
    return h2 @ w3.T + b3


if __name__ == "__main__":
    key = jax.random.PRNGKey(0)
    kp, kx1, kx2 = jax.random.split(key, 3)
    params = init_params(kp)
    slab = pack_params(params)

    # Small batch (DQN action selection): single full-array block.
    batch_s = 8
    x_small = jax.random.normal(kx1, (batch_s, STATE_SPACE), jnp.float32)
    out_small = jax.block_until_ready(shared_net_forward(x_small, slab))
    ref_small = reference_forward(x_small, params)
    assert out_small.shape == (batch_s, ACTION_SPACE)
    assert jnp.allclose(out_small, ref_small, atol=2e-5, rtol=2e-5)

    # Larger batch: exercises >=2 grid steps (v7x megacore sharding) and the
    # masked edge block (600 is not a multiple of the 384-lane tile chosen).
    batch_b = 600
    x_big = jax.random.normal(kx2, (batch_b, STATE_SPACE), jnp.float32)
    out_big = jax.block_until_ready(shared_net_forward(x_big, slab))
    ref_big = reference_forward(x_big, params)
    assert out_big.shape == (batch_b, ACTION_SPACE)
    assert jnp.allclose(out_big, ref_big, atol=2e-5, rtol=2e-5)

    print("KERNEL_OK")
</pallas_src>

<mosaic_0001>
module attributes {stable_mosaic.version = 11 : i64} {
  func.func @mlp_kernel(%arg0: i32, %arg1: memref<4x8xf32, #tpu.memory_space<vmem>>, %arg2: memref<96x128xf32, #tpu.memory_space<vmem>>, %arg3: memref<2x8xf32, #tpu.memory_space<vmem>>) attributes {dimension_semantics = [#tpu.dimension_semantics<parallel>], iteration_bounds = array<i64: 1>, scalar_prefetch = 0 : i64, scratch_operands = 0 : i64, tpu.core_type = #tpu.core_type<tc>, window_params = [{transform_indices = @transform_0, window_bounds = array<i64: 4, 8>}, {pipeline_mode = #tpu.pipeline_mode<synchronous>, transform_indices = @transform_1, window_bounds = array<i64: 96, 128>}, {transform_indices = @transform_2, window_bounds = array<i64: 2, 8>}]} {
    %c0 = arith.constant 0 : index
    %c0_0 = arith.constant 0 : index
    %0 = vector.load %arg1[%c0, %c0_0] : memref<4x8xf32, #tpu.memory_space<vmem>>, vector<4x8xf32>
    %c0_1 = arith.constant 0 : index
    %c0_2 = arith.constant 0 : index
    %1 = vector.load %arg2[%c0_1, %c0_2] : memref<96x128xf32, #tpu.memory_space<vmem>>, vector<56x4xf32>
    %c0_3 = arith.constant 0 : index
    %c120 = arith.constant 120 : index
    %2 = vector.load %arg2[%c0_3, %c120] : memref<96x128xf32, #tpu.memory_space<vmem>>, vector<56x1xf32>
    %c56 = arith.constant 56 : index
    %c0_4 = arith.constant 0 : index
    %3 = vector.load %arg2[%c56, %c0_4] : memref<96x128xf32, #tpu.memory_space<vmem>>, vector<32x56xf32>
    %c56_5 = arith.constant 56 : index
    %c120_6 = arith.constant 120 : index
    %4 = vector.load %arg2[%c56_5, %c120_6] : memref<96x128xf32, #tpu.memory_space<vmem>>, vector<32x1xf32>
    %c88 = arith.constant 88 : index
    %c0_7 = arith.constant 0 : index
    %5 = vector.load %arg2[%c88, %c0_7] : memref<96x128xf32, #tpu.memory_space<vmem>>, vector<2x32xf32>
    %c88_8 = arith.constant 88 : index
    %c120_9 = arith.constant 120 : index
    %6 = vector.load %arg2[%c88_8, %c120_9] : memref<96x128xf32, #tpu.memory_space<vmem>>, vector<2x1xf32>
    %cst = arith.constant dense<0.000000e+00> : vector<56x8xf32>
    %7 = tpu.matmul %1, %0, %cst {dimension_numbers = #tpu.dot_dimension_numbers<[1], [0], [0], [1], [0, 0, 1, 1], [], []>} : vector<56x4xf32>, vector<4x8xf32>, vector<56x8xf32> -> vector<56x8xf32>
    %8 = vector.broadcast %2 : vector<56x1xf32> to vector<56x8xf32>
    %9 = arith.addf %7, %8 : vector<56x8xf32>
    %cst_10 = arith.constant 0.000000e+00 : f32
    %10 = vector.broadcast %cst_10 : f32 to vector<56x8xf32>
    %11 = arith.maximumf %9, %10 : vector<56x8xf32>
    %cst_11 = arith.constant dense<0.000000e+00> : vector<32x8xf32>
    %12 = tpu.matmul %3, %11, %cst_11 {dimension_numbers = #tpu.dot_dimension_numbers<[1], [0], [0], [1], [0, 0, 1, 1], [], []>} : vector<32x56xf32>, vector<56x8xf32>, vector<32x8xf32> -> vector<32x8xf32>
    %13 = vector.broadcast %4 : vector<32x1xf32> to vector<32x8xf32>
    %14 = arith.addf %12, %13 : vector<32x8xf32>
    %cst_12 = arith.constant 0.000000e+00 : f32
    %15 = vector.broadcast %cst_12 : f32 to vector<32x8xf32>
    %16 = arith.maximumf %14, %15 : vector<32x8xf32>
    %cst_13 = arith.constant dense<0.000000e+00> : vector<2x8xf32>
    %17 = tpu.matmul %5, %16, %cst_13 {dimension_numbers = #tpu.dot_dimension_numbers<[1], [0], [0], [1], [0, 0, 1, 1], [], []>} : vector<2x32xf32>, vector<32x8xf32>, vector<2x8xf32> -> vector<2x8xf32>
    %18 = vector.broadcast %6 : vector<2x1xf32> to vector<2x8xf32>
    %19 = arith.addf %17, %18 : vector<2x8xf32>
    %c0_14 = arith.constant 0 : index
    %c0_15 = arith.constant 0 : index
    %20 = vector.load %arg3[%c0_14, %c0_15] : memref<2x8xf32, #tpu.memory_space<vmem>>, vector<2x8xf32>
    tpu.vector_store %arg3[%c0_14, %c0_15], %19 {strides = array<i32>} : memref<2x8xf32, #tpu.memory_space<vmem>>, vector<2x8xf32>,
    return
  }
  func.func @transform_0(%arg0: i32) -> (i32, i32) {
    %c0_i32 = arith.constant 0 : i32
    %c0_i32_0 = arith.constant 0 : i32
    return %c0_i32, %arg0 : i32, i32
  }
  func.func @transform_1(%arg0: i32) -> (i32, i32) {
    %c0_i32 = arith.constant 0 : i32
    %c0_i32_0 = arith.constant 0 : i32
    %c0_i32_1 = arith.constant 0 : i32
    return %c0_i32, %c0_i32_0 : i32, i32
  }
  func.func @transform_2(%arg0: i32) -> (i32, i32) {
    %c0_i32 = arith.constant 0 : i32
    %c0_i32_0 = arith.constant 0 : i32
    return %c0_i32, %arg0 : i32, i32
  }
}

</mosaic_0001>

<llo_original>
// kernel: tpu_custom_call.1
$region0: #{tpu_custom_call.1}
  #allocation0 [shape = 'u32[]', space=smem, size = 0x4, offset = 0x4, fixed_abs, tag = 'smem constant byte address 0x4 - core index']
  #allocation1 [shape = 'u32[144,128]{1,0:T(1,128)}', space=vmem, size = 0x12000, scoped, tag = 'internal scratch']
  %s0 = inlined_call_operand.hbm [shape: f32[4,8], index: 0, kind: input, shape index: {}]
  %s1 = inlined_call_operand.hbm [shape: f32[96,128], index: 1, kind: input, shape index: {}]
  %s2 = inlined_call_operand.hbm [shape: f32[2,8], index: 2, kind: output, shape index: {}]
  %s3 = sld [smem:[#allocation0]]
  $region26: #{tpu_custom_call.1} parent=0
    _
  %s5 = ssub.s32 1, %s3
  %s6 = scalar_select 0, %s5, %s3
  $region1: #{tpu_custom_call.1} parent=0
    #allocation2 [shape = 'u8[2048]{0}', space=vmem, size = 0x800, scoped, tag = 'input window, operand 0, single buffered']
    #allocation3 [shape = 's32[1]{0}', space=sflag, size = 0x4, scoped, tag = 'scoped memory for tpu_custom_call.1']
    #allocation4 [shape = 's32[1]{0}', space=sflag, size = 0x4, scoped, tag = 'scoped memory for tpu_custom_call.1']
    #allocation5 [shape = 'u8[49152]{0}', space=vmem, size = 0xc000, scoped, tag = 'input window, operand 1, single buffered']
    #allocation6 [shape = 's32[1]{0}', space=sflag, size = 0x4, scoped, tag = 'scoped memory for tpu_custom_call.1']
    #allocation7 [shape = 'u8[1024]{0}', space=vmem, size = 0x400, scoped, tag = 'output window, operand 0, single buffered']
    %7 = vsyncpa [#allocation3], 0
    %8 = vsyncpa [#allocation6], 0
    %9 = vsyncpa [#allocation4], 0
    // Predicated region
    $region2: #{tpu_custom_call.1} parent=1 // pred_check
      _
    $region3: #{tpu_custom_call.1} parent=1 // pred_check_branch
      %11 = sbr.rel (0) target = $region5
    $region4: #{tpu_custom_call.1} parent=1 // pred_region
      %s13 = ssub.s32 64, 64
      %14 = vsyncadd [#allocation3], %s13
      %s16 = sshll.u32 [#allocation2], 4
      %s17 = int_to_ptr.vmem [resolvable:$true] %s16
      %19 = dma.hbm_to_vmem [thread:$0]  %s0, 64, %s17, [#allocation3]
    $region5: #{tpu_custom_call.1} parent=1 // pred_fallthru
      _
    // Predicated region
    $region6: #{tpu_custom_call.1} parent=1 // pred_check
      _
    $region7: #{tpu_custom_call.1} parent=1 // pred_check_branch
      %21 = sbr.rel (0) target = $region9
    $region8: #{tpu_custom_call.1} parent=1 // pred_region
      %s23 = ssub.s32 1536, 1536
      %24 = vsyncadd [#allocation6], %s23
      %s25 = sshll.u32 [#allocation5], 4
      %s26 = int_to_ptr.vmem [resolvable:$true] %s25
      %31 = dma.hbm_to_vmem [thread:$0]  %s1, 1536, %s26, [#allocation6], 128, 128, 8
    $region9: #{tpu_custom_call.1} parent=1 // pred_fallthru
      _
    // Predicated region
    $region10: #{tpu_custom_call.1} parent=1 // pred_check
      _
    $region11: #{tpu_custom_call.1} parent=1 // pred_check_branch
      %33 = sbr.rel (0) target = $region13
    $region12: #{tpu_custom_call.1} parent=1 // pred_region
      %34 = dma.done [#allocation3], 64
    $region13: #{tpu_custom_call.1} parent=1 // pred_fallthru
      _
    // Predicated region
    $region14: #{tpu_custom_call.1} parent=1 // pred_check
      _
    $region15: #{tpu_custom_call.1} parent=1 // pred_check_branch
      %36 = sbr.rel (0) target = $region17
    $region16: #{tpu_custom_call.1} parent=1 // pred_region
      %37 = dma.done [#allocation6], 1536
    $region17: #{tpu_custom_call.1} parent=1 // pred_fallthru
      _
    %v38 = vld [vmem:[#allocation2] sm:$0xf]
    %v39 = vld [vmem:[#allocation5] sm:$0xff]
    %v40 = vld [vmem:[#allocation5 + $0x8] sm:$0xff]
    %v41 = vld [vmem:[#allocation5 + $0x10] sm:$0xff]
    %v42 = vld [vmem:[#allocation5 + $0x18] sm:$0xff]
    %v43 = vld [vmem:[#allocation5 + $0x20] sm:$0xff]
    %v44 = vld [vmem:[#allocation5 + $0x28] sm:$0xff]
    %v45 = vld [vmem:[#allocation5 + $0x30] sm:$0xff]
    %v46 = vld [vmem:[#allocation5 + $0x38] sm:$0xff]
    %v47 = vld [vmem:[#allocation5 + $0x40] sm:$0xff]
    %v48 = vld [vmem:[#allocation5 + $0x48] sm:$0xff]
    %v49 = vld [vmem:[#allocation5 + $0x50] sm:$0xff]
    %v50 = vld [vmem:[#allocation5 + $0x58] sm:$0x3]
    %52 = vset.pattern.permute.xlu0 120
    %53 = vperm.xlu0 %52, %v39
    %v54 = vpop.permute.xlu0 %53
    %57 = vset.pattern.permute.xlu0 120
    %58 = vperm.xlu0 %57, %v40
    %v59 = vpop.permute.xlu0 %58
    %62 = vset.pattern.permute.xlu0 120
    %63 = vperm.xlu0 %62, %v41
    %v64 = vpop.permute.xlu0 %63
    %67 = vset.pattern.permute.xlu0 120
    %68 = vperm.xlu0 %67, %v42
    %v69 = vpop.permute.xlu0 %68
    %72 = vset.pattern.permute.xlu0 120
    %73 = vperm.xlu0 %72, %v43
    %v74 = vpop.permute.xlu0 %73
    %77 = vset.pattern.permute.xlu0 120
    %78 = vperm.xlu0 %77, %v44
    %v79 = vpop.permute.xlu0 %78
    %82 = vset.pattern.permute.xlu0 120
    %83 = vperm.xlu0 %82, %v45
    %v84 = vpop.permute.xlu0 %83
    %vm86 = vcmask 31744
    %v87 = vsel %vm86, %v39, 0
    %v89 = vsel %vm86, %v40, 0
    %v91 = vsel %vm86, %v41, 0
    %v93 = vsel %vm86, %v42, 0
    %v95 = vsel %vm86, %v43, 0
    %v97 = vsel %vm86, %v44, 0
    %v99 = vsel %vm86, %v45, 0
    %vm101 = vcmask 1043456
    %v103 = vsel %vm101, %v38, 0
    %105 = vmatprep.subr.mxu0 0.0
    %106 = vmatpush1.msra.mxu0 %v103
    %107 = vmatprep.subr.mxu0 0.0
    %108 = vmatpush1.msra.mxu0 0.0
    %109 = vmatprep.subr.mxu0 0.0
    %110 = vmatpush1.msra.mxu0 0.0
    %111 = vmatprep.subr.mxu0 0.0
    %112 = vmatpush1.msra.mxu0 0.0
    %113 = vmatprep.subr.mxu0 0.0
    %114 = vmatpush1.msra.mxu0 0.0
    %115 = vmatprep.subr.mxu0 0.0
    %116 = vmatpush1.msra.mxu0 0.0
    %117 = vmatprep.subr.mxu0 0.0
    %118 = vmatpush1.msra.mxu0 0.0
    %119 = vmatprep.subr.mxu0 0.0
    %120 = vmatpush1.msra.mxu0 0.0
    %121 = vmatprep.subr.mxu0 0.0
    %122 = vmatpush1.msra.mxu0 0.0
    %123 = vmatprep.subr.mxu0 0.0
    %124 = vmatpush1.msra.mxu0 0.0
    %125 = vmatprep.subr.mxu0 0.0
    %126 = vmatpush1.msra.mxu0 0.0
    %127 = vmatprep.subr.mxu0 0.0
    %128 = vmatpush1.msra.mxu0 0.0
    %129 = vmatprep.subr.mxu0 0.0
    %130 = vmatpush1.msra.mxu0 0.0
    %131 = vmatprep.subr.mxu0 0.0
    %132 = vmatpush1.msra.mxu0 0.0
    %133 = vmatprep.subr.mxu0 0.0
    %134 = vmatpush1.msra.mxu0 0.0
    %135 = vmatprep.subr.mxu0 0.0
    %136 = vmatpush1.msra.mxu0 0.0
    %137 = vmatprep.subr.mxu0 0.0
    %138 = vmatpush1.msra.mxu0 0.0
    %139 = vmatprep.subr.mxu0 0.0
    %140 = vmatpush1.msra.mxu0 0.0
    %141 = vmatprep.subr.mxu0 0.0
    %142 = vmatpush1.msra.mxu0 0.0
    %143 = vmatprep.subr.mxu0 0.0
    %144 = vmatpush1.msra.mxu0 0.0
    %145 = vmatprep.subr.mxu0 0.0
    %146 = vmatpush1.msra.mxu0 0.0
    %147 = vmatprep.subr.mxu0 0.0
    %148 = vmatpush1.msra.mxu0 0.0
    %149 = vmatprep.subr.mxu0 0.0
    %150 = vmatpush1.msra.mxu0 0.0
    %151 = vmatprep.subr.mxu0 0.0
    %152 = vmatpush1.msra.mxu0 0.0
    %153 = vmatprep.subr.mxu0 0.0
    %154 = vmatpush1.msra.mxu0 0.0
    %155 = vmatprep.subr.mxu0 0.0
    %156 = vmatpush1.msra.mxu0 0.0
    %157 = vmatprep.subr.mxu0 0.0
    %158 = vmatpush1.msra.mxu0 0.0
    %159 = vmatprep.subr.mxu0 0.0
    %160 = vmatpush1.msra.mxu0 0.0
    %161 = vmatprep.subr.mxu0 0.0
    %162 = vmatpush1.msra.mxu0 0.0
    %163 = vmatprep.subr.mxu0 0.0
    %164 = vmatpush1.msra.mxu0 0.0
    %165 = vmatprep.subr.mxu0 0.0
    %166 = vmatpush1.msra.mxu0 0.0
    %167 = vmatprep.subr.mxu0 0.0
    %168 = vmatpush1.msra.mxu0 0.0
    %169 = vmatprep.mubr.f32.mxu0 0.0
    %170 = vmatmul.mubr.f32.gmra.mrb[0].mxu0 %v87
    %v171 = vpop.f32.mrb[0].mxu0
    %v172 = vadd.f32 %v54, %v171
    %v173 = vpop.f32.mrb[0].mxu0
    %174 = vmatprep.mubr.f32.mxu0 0.0
    %175 = vmatmul.mubr.f32.gmra.mrb[0].mxu0 %v89
    %v176 = vpop.f32.mrb[0].mxu0
    %v177 = vadd.f32 %v59, %v176
    %v178 = vpop.f32.mrb[0].mxu0
    %179 = vmatprep.mubr.f32.mxu0 0.0
    %180 = vmatmul.mubr.f32.gmra.mrb[0].mxu0 %v91
    %v181 = vpop.f32.mrb[0].mxu0
    %v182 = vadd.f32 %v64, %v181
    %v183 = vpop.f32.mrb[0].mxu0
    %184 = vmatprep.mubr.f32.mxu0 0.0
    %185 = vmatmul.mubr.f32.gmra.mrb[0].mxu0 %v93
    %v186 = vpop.f32.mrb[0].mxu0
    %v187 = vadd.f32 %v69, %v186
    %v188 = vpop.f32.mrb[0].mxu0
    %189 = vmatprep.mubr.f32.mxu0 0.0
    %190 = vmatmul.mubr.f32.gmra.mrb[0].mxu0 %v95
    %v191 = vpop.f32.mrb[0].mxu0
    %v192 = vadd.f32 %v74, %v191
    %v193 = vpop.f32.mrb[0].mxu0
    %194 = vmatprep.mubr.f32.mxu0 0.0
    %195 = vmatmul.mubr.f32.gmra.mrb[0].mxu0 %v97
    %v196 = vpop.f32.mrb[0].mxu0
    %v197 = vadd.f32 %v79, %v196
    %v198 = vpop.f32.mrb[0].mxu0
    %199 = vmatprep.mubr.f32.mxu0 0.0
    %200 = vmatmul.mubr.f32.gmra.mrb[0].mxu0 %v99
    %v201 = vpop.f32.mrb[0].mxu0
    %v202 = vadd.f32 %v84, %v201
    %v203 = vpop.f32.mrb[0].mxu0
    %204 = vdwg.mxu0
    %v205 = vmax.f32 %v172, 0.0
    %v206 = vmax.f32 %v177, 0.0
    %v207 = vmax.f32 %v182, 0.0
    %v208 = vmax.f32 %v187, 0.0
    %v209 = vmax.f32 %v192, 0.0
    %v210 = vmax.f32 %v197, 0.0
    %v211 = vmax.f32 %v202, 0.0
    %213 = vset.pattern.permute.xlu0 120
    %214 = vperm.xlu0 %213, %v46
    %v215 = vpop.permute.xlu0 %214
    %218 = vset.pattern.permute.xlu0 120
    %219 = vperm.xlu0 %218, %v47
    %v220 = vpop.permute.xlu0 %219
    %223 = vset.pattern.permute.xlu0 120
    %224 = vperm.xlu0 %223, %v48
    %v225 = vpop.permute.xlu0 %224
    %228 = vset.pattern.permute.xlu0 120
    %229 = vperm.xlu0 %228, %v49
    %v230 = vpop.permute.xlu0 %229
    %vm232 = vcmask 457728
    %v233 = vsel %vm232, %v46, 0
    %v235 = vsel %vm232, %v47, 0
    %v237 = vsel %vm232, %v48, 0
    %v239 = vsel %vm232, %v49, 0
    %241 = vmatprep.subr.mxu0 0.0
    %242 = vmatpush1.msra.mxu0 %v205
    %243 = vmatprep.subr.mxu0 0.0
    %244 = vmatpush1.msra.mxu0 %v206
    %245 = vmatprep.subr.mxu0 0.0
    %246 = vmatpush1.msra.mxu0 %v207
    %247 = vmatprep.subr.mxu0 0.0
    %248 = vmatpush1.msra.mxu0 %v208
    %249 = vmatprep.subr.mxu0 0.0
    %250 = vmatpush1.msra.mxu0 %v209
    %251 = vmatprep.subr.mxu0 0.0
    %252 = vmatpush1.msra.mxu0 %v210
    %253 = vmatprep.subr.mxu0 0.0
    %254 = vmatpush1.msra.mxu0 %v211
    %255 = vmatprep.subr.mxu0 0.0
    %256 = vmatpush1.msra.mxu0 0.0
    %257 = vmatprep.subr.mxu0 0.0
    %258 = vmatpush1.msra.mxu0 0.0
    %259 = vmatprep.subr.mxu0 0.0
    %260 = vmatpush1.msra.mxu0 0.0
    %261 = vmatprep.subr.mxu0 0.0
    %262 = vmatpush1.msra.mxu0 0.0
    %263 = vmatprep.subr.mxu0 0.0
    %264 = vmatpush1.msra.mxu0 0.0
    %265 = vmatprep.subr.mxu0 0.0
    %266 = vmatpush1.msra.mxu0 0.0
    %267 = vmatprep.subr.mxu0 0.0
    %268 = vmatpush1.msra.mxu0 0.0
    %269 = vmatprep.subr.mxu0 0.0
    %270 = vmatpush1.msra.mxu0 0.0
    %271 = vmatprep.subr.mxu0 0.0
    %272 = vmatpush1.msra.mxu0 0.0
    %273 = vmatprep.subr.mxu0 0.0
    %274 = vmatpush1.msra.mxu0 0.0
    %275 = vmatprep.subr.mxu0 0.0
    %276 = vmatpush1.msra.mxu0 0.0
    %277 = vmatprep.subr.mxu0 0.0
    %278 = vmatpush1.msra.mxu0 0.0
    %279 = vmatprep.subr.mxu0 0.0
    %280 = vmatpush1.msra.mxu0 0.0
    %281 = vmatprep.subr.mxu0 0.0
    %282 = vmatpush1.msra.mxu0 0.0
    %283 = vmatprep.subr.mxu0 0.0
    %284 = vmatpush1.msra.mxu0 0.0
    %285 = vmatprep.subr.mxu0 0.0
    %286 = vmatpush1.msra.mxu0 0.0
    %287 = vmatprep.subr.mxu0 0.0
    %288 = vmatpush1.msra.mxu0 0.0
    %289 = vmatprep.subr.mxu0 0.0
    %290 = vmatpush1.msra.mxu0 0.0
    %291 = vmatprep.subr.mxu0 0.0
    %292 = vmatpush1.msra.mxu0 0.0
    %293 = vmatprep.subr.mxu0 0.0
    %294 = vmatpush1.msra.mxu0 0.0
    %295 = vmatprep.subr.mxu0 0.0
    %296 = vmatpush1.msra.mxu0 0.0
    %297 = vmatprep.subr.mxu0 0.0
    %298 = vmatpush1.msra.mxu0 0.0
    %299 = vmatprep.subr.mxu0 0.0
    %300 = vmatpush1.msra.mxu0 0.0
    %301 = vmatprep.subr.mxu0 0.0
    %302 = vmatpush1.msra.mxu0 0.0
    %303 = vmatprep.subr.mxu0 0.0
    %304 = vmatpush1.msra.mxu0 0.0
    %305 = vmatprep.mubr.f32.mxu0 0.0
    %306 = vmatmul.mubr.f32.gmra.mrb[0].mxu0 %v233
    %v307 = vpop.f32.mrb[0].mxu0
    %v308 = vadd.f32 %v215, %v307
    %v309 = vpop.f32.mrb[0].mxu0
    %310 = vmatprep.mubr.f32.mxu0 0.0
    %311 = vmatmul.mubr.f32.gmra.mrb[0].mxu0 %v235
    %v312 = vpop.f32.mrb[0].mxu0
    %v313 = vadd.f32 %v220, %v312
    %v314 = vpop.f32.mrb[0].mxu0
    %315 = vmatprep.mubr.f32.mxu0 0.0
    %316 = vmatmul.mubr.f32.gmra.mrb[0].mxu0 %v237
    %v317 = vpop.f32.mrb[0].mxu0
    %v318 = vadd.f32 %v225, %v317
    %v319 = vpop.f32.mrb[0].mxu0
    %320 = vmatprep.mubr.f32.mxu0 0.0
    %321 = vmatmul.mubr.f32.gmra.mrb[0].mxu0 %v239
    %v322 = vpop.f32.mrb[0].mxu0
    %v323 = vadd.f32 %v230, %v322
    %v324 = vpop.f32.mrb[0].mxu0
    %325 = vdwg.mxu0
    %v326 = vmax.f32 %v308, 0.0
    %v327 = vmax.f32 %v313, 0.0
    %v328 = vmax.f32 %v318, 0.0
    %v329 = vmax.f32 %v323, 0.0
    %331 = vset.pattern.permute.xlu0 120
    %332 = vperm.xlu0 %331, %v50
    %v333 = vpop.permute.xlu0 %332
    %vm335 = vcmask 261120
    %v336 = vsel %vm335, %v50, 0
    %338 = vmatprep.subr.mxu0 0.0
    %339 = vmatpush1.msra.mxu0 %v326
    %340 = vmatprep.subr.mxu0 0.0
    %341 = vmatpush1.msra.mxu0 %v327
    %342 = vmatprep.subr.mxu0 0.0
    %343 = vmatpush1.msra.mxu0 %v328
    %344 = vmatprep.subr.mxu0 0.0
    %345 = vmatpush1.msra.mxu0 %v329
    %346 = vmatprep.subr.mxu0 0.0
    %347 = vmatpush1.msra.mxu0 0.0
    %348 = vmatprep.subr.mxu0 0.0
    %349 = vmatpush1.msra.mxu0 0.0
    %350 = vmatprep.subr.mxu0 0.0
    %351 = vmatpush1.msra.mxu0 0.0
    %352 = vmatprep.subr.mxu0 0.0
    %353 = vmatpush1.msra.mxu0 0.0
    %354 = vmatprep.subr.mxu0 0.0
    %355 = vmatpush1.msra.mxu0 0.0
    %356 = vmatprep.subr.mxu0 0.0
    %357 = vmatpush1.msra.mxu0 0.0
    %358 = vmatprep.subr.mxu0 0.0
    %359 = vmatpush1.msra.mxu0 0.0
    %360 = vmatprep.subr.mxu0 0.0
    %361 = vmatpush1.msra.mxu0 0.0
    %362 = vmatprep.subr.mxu0 0.0
    %363 = vmatpush1.msra.mxu0 0.0
    %364 = vmatprep.subr.mxu0 0.0
    %365 = vmatpush1.msra.mxu0 0.0
    %366 = vmatprep.subr.mxu0 0.0
    %367 = vmatpush1.msra.mxu0 0.0
    %368 = vmatprep.subr.mxu0 0.0
    %369 = vmatpush1.msra.mxu0 0.0
    %370 = vmatprep.subr.mxu0 0.0
    %371 = vmatpush1.msra.mxu0 0.0
    %372 = vmatprep.subr.mxu0 0.0
    %373 = vmatpush1.msra.mxu0 0.0
    %374 = vmatprep.subr.mxu0 0.0
    %375 = vmatpush1.msra.mxu0 0.0
    %376 = vmatprep.subr.mxu0 0.0
    %377 = vmatpush1.msra.mxu0 0.0
    %378 = vmatprep.subr.mxu0 0.0
    %379 = vmatpush1.msra.mxu0 0.0
    %380 = vmatprep.subr.mxu0 0.0
    %381 = vmatpush1.msra.mxu0 0.0
    %382 = vmatprep.subr.mxu0 0.0
    %383 = vmatpush1.msra.mxu0 0.0
    %384 = vmatprep.subr.mxu0 0.0
    %385 = vmatpush1.msra.mxu0 0.0
    %386 = vmatprep.subr.mxu0 0.0
    %387 = vmatpush1.msra.mxu0 0.0
    %388 = vmatprep.subr.mxu0 0.0
    %389 = vmatpush1.msra.mxu0 0.0
    %390 = vmatprep.subr.mxu0 0.0
    %391 = vmatpush1.msra.mxu0 0.0
    %392 = vmatprep.subr.mxu0 0.0
    %393 = vmatpush1.msra.mxu0 0.0
    %394 = vmatprep.subr.mxu0 0.0
    %395 = vmatpush1.msra.mxu0 0.0
    %396 = vmatprep.subr.mxu0 0.0
    %397 = vmatpush1.msra.mxu0 0.0
    %398 = vmatprep.subr.mxu0 0.0
    %399 = vmatpush1.msra.mxu0 0.0
    %400 = vmatprep.subr.mxu0 0.0
    %401 = vmatpush1.msra.mxu0 0.0
    %402 = vmatprep.mubr.f32.mxu0 0.0
    %403 = vmatmul.mubr.f32.gmra.mrb[0].mxu0 %v336
    %v404 = vpop.f32.mrb[0].mxu0
    %v405 = vadd.f32 %v333, %v404
    %v406 = vpop.f32.mrb[0].mxu0
    %407 = vdwg.mxu0
    %vm408 = vcmask 58368
    %409 = vst.msk [vmem:[#allocation7] sm:$0x3] %vm408, %v405
    // Predicated region
    $region18: #{tpu_custom_call.1} parent=1 // pred_check
      _
    $region19: #{tpu_custom_call.1} parent=1 // pred_check_branch
      %411 = sbr.rel (0) target = $region21
    $region20: #{tpu_custom_call.1} parent=1 // pred_region
      %s413 = ssub.s32 32, 32
      %414 = vsyncadd [#allocation4], %s413
      %s416 = sshll.u32 [#allocation7], 4
      %s417 = int_to_ptr.vmem [resolvable:$true] %s416
      %419 = dma.vmem_to_hbm [thread:$0]  %s417, 32, %s2, [#allocation4]
    $region21: #{tpu_custom_call.1} parent=1 // pred_fallthru
      _
    // Predicated region
    $region22: #{tpu_custom_call.1} parent=1 // pred_check
      _
    $region23: #{tpu_custom_call.1} parent=1 // pred_check_branch
      %421 = sbr.rel (0) target = $region25
    $region24: #{tpu_custom_call.1} parent=1 // pred_region
      %422 = dma.done [#allocation4], 32
    $region25: #{tpu_custom_call.1} parent=1 // pred_fallthru
      _
    %423 = vsyncpa [#allocation3], 1
    %424 = vsyncpa [#allocation6], 1
    %425 = vsyncpa [#allocation4], 1

</llo_original>
